<compile_context>
chip_gen: v5e
topology: v5e:2x2
jax: 0.10.0
libtpu: 0.0.40
codegen_flags: <defaults>
</compile_context>

<pallas_src>
import functools

import jax
import jax.numpy as jnp
from jax.experimental import pallas as pl
from jax.experimental.pallas import tpu as pltpu

BN_EPS = 1e-5


def _round_up(x, m):
    return ((x + m - 1) // m) * m


# ----------------------------------------------------------------------------
# Pallas kernel: tiled GEMM + bias epilogue (+ fused 1x1-shortcut GEMM or
# residual add) + optional ReLU.
#   out = act( patches @ W + bias [ + xs @ Ws ] [ + residual ] )
# BN scales are pre-folded into W / Ws columns; bias holds (beta - mean*scale)
# summed over both branches where applicable.
# ----------------------------------------------------------------------------
def _fused_gemm_kernel(relu, mode, *refs):
    # mode: 0 = plain, 1 = + residual tile, 2 = + fused 1x1-shortcut GEMM
    if mode == 2:
        x_ref, w_ref, b_ref, xs_ref, ws_ref, o_ref, acc_ref = refs
    elif mode == 1:
        x_ref, w_ref, b_ref, r_ref, o_ref, acc_ref = refs
    else:
        x_ref, w_ref, b_ref, o_ref, acc_ref = refs

    k = pl.program_id(2)

    @pl.when(k == 0)
    def _():
        acc_ref[...] = jnp.zeros_like(acc_ref)

    acc_ref[...] += jnp.dot(
        x_ref[...], w_ref[...], preferred_element_type=jnp.float32)

    if mode == 2:
        # The shortcut GEMM has its own (small) contraction dim: do it once.
        @pl.when(k == 0)
        def _():
            acc_ref[...] += jnp.dot(
                xs_ref[...], ws_ref[...], preferred_element_type=jnp.float32)

    @pl.when(k == pl.num_programs(2) - 1)
    def _():
        out = acc_ref[...] + b_ref[...]          # folded-BN bias (per channel)
        if mode == 1:
            out = out + r_ref[...]               # identity residual
        if relu:
            out = jnp.maximum(out, 0.0)
        o_ref[...] = out.astype(o_ref.dtype)


def fused_gemm_bn(patches, w, bias, *, residual=None, shortcut=None,
                  relu=True, tm=256, tn=128, tk=512,
                  compute_dtype=jnp.bfloat16):
    """Fused (patches @ w) + bias [+ shortcut GEMM | + residual] [+ ReLU].

    patches: (M, K) f32; w: (K, Cout) f32 (BN scale folded in); bias: (Cout,).
    shortcut: optional (xs (M, Ks), ws (Ks, Cout)) pair, also scale-folded.
    Tile defaults work on v5e/v6e/v7x; on v6e/v7x tn=256 / larger tm can be
    passed (re-derive the VMEM budget for v7x's 64 MiB per TC).
    """
    assert residual is None or shortcut is None
    M, K = patches.shape
    Cp = w.shape[1]

    # --- pad to lane-dense, tile-aligned shapes ------------------------------
    tm = min(tm, _round_up(M, 8))
    m_pad = _round_up(M, tm)
    c_pad = _round_up(Cp, 128)
    tn = min(tn, c_pad)
    while c_pad % tn:
        tn -= 128
    k_pad = _round_up(K, 128)
    tk = min(tk, k_pad)
    while k_pad % tk:
        tk -= 128

    def pad2(a, r, c):
        return jnp.pad(a, ((0, r - a.shape[0]), (0, c - a.shape[1])))

    x_p = pad2(patches, m_pad, k_pad).astype(compute_dtype)
    w_p = pad2(w, k_pad, c_pad).astype(compute_dtype)
    b_p = jnp.pad(bias, (0, c_pad - Cp)).reshape(1, c_pad).astype(jnp.float32)

    in_specs = [
        pl.BlockSpec((tm, tk), lambda i, j, k: (i, k)),      # patches
        pl.BlockSpec((tk, tn), lambda i, j, k: (k, j)),      # weight
        pl.BlockSpec((1, tn), lambda i, j, k: (0, j)),       # bias (k-invariant)
    ]
    inputs = [x_p, w_p, b_p]
    io_alias = {}
    flops = 2 * m_pad * k_pad * c_pad
    bytes_accessed = x_p.size * 2 + w_p.size * 2 + b_p.size * 4 + m_pad * c_pad * 4

    if residual is not None:
        mode = 1
        r_p = pad2(residual, m_pad, c_pad).astype(jnp.float32)
        in_specs.append(pl.BlockSpec((tm, tn), lambda i, j, k: (i, j)))
        inputs.append(r_p)
        io_alias = {3: 0}          # residual tile aliases the output buffer
        bytes_accessed += r_p.size * 4
    elif shortcut is not None:
        mode = 2
        xs, ws = shortcut
        ks_pad = _round_up(xs.shape[1], 128)
        xs_p = pad2(xs, m_pad, ks_pad).astype(compute_dtype)
        ws_p = pad2(ws, ks_pad, c_pad).astype(compute_dtype)
        in_specs += [
            pl.BlockSpec((tm, ks_pad), lambda i, j, k: (i, 0)),   # k-invariant
            pl.BlockSpec((ks_pad, tn), lambda i, j, k: (0, j)),
        ]
        inputs += [xs_p, ws_p]
        flops += 2 * m_pad * ks_pad * c_pad
        bytes_accessed += xs_p.size * 2 + ws_p.size * 2
    else:
        mode = 0

    kernel = functools.partial(_fused_gemm_kernel, relu, mode)

    out = pl.pallas_call(
        kernel,
        out_shape=jax.ShapeDtypeStruct((m_pad, c_pad), jnp.float32),
        grid_spec=pltpu.PrefetchScalarGridSpec(
            num_scalar_prefetch=0,
            grid=(m_pad // tm, c_pad // tn, k_pad // tk),
            in_specs=in_specs,
            out_specs=pl.BlockSpec((tm, tn), lambda i, j, k: (i, j)),
            scratch_shapes=[pltpu.VMEM((tm, tn), jnp.float32)],
        ),
        compiler_params=pltpu.CompilerParams(
            dimension_semantics=("parallel", "parallel", "arbitrary"),
            vmem_limit_bytes=48 * 1024 * 1024,
        ),
        cost_estimate=pl.CostEstimate(
            flops=flops, transcendentals=0, bytes_accessed=bytes_accessed),
        input_output_aliases=io_alias,
    )(*inputs)

    return out[:M, :Cp]


# ----------------------------------------------------------------------------
# Glue: im2col, weight layout, BN folding
# ----------------------------------------------------------------------------
def im2col_3x3(x_nhwc, stride):
    """3x3 conv, padding=1.  Returns (N*Ho*Wo, 9*C) patch matrix."""
    N, H, W, C = x_nhwc.shape
    Ho = (H + 2 - 3) // stride + 1
    Wo = (W + 2 - 3) // stride + 1
    xp = jnp.pad(x_nhwc, ((0, 0), (1, 1), (1, 1), (0, 0)))
    cols = []
    for kh in range(3):
        for kw in range(3):
            sl = xp[:, kh:kh + (Ho - 1) * stride + 1:stride,
                       kw:kw + (Wo - 1) * stride + 1:stride, :]
            cols.append(sl)
    patches = jnp.stack(cols, axis=3)                      # (N, Ho, Wo, 9, C)
    return patches.reshape(N * Ho * Wo, 9 * C), (N, Ho, Wo)


def torch_conv3x3_weight_to_matrix(w_oihw):
    """(Cout, Cin, 3, 3) -> (9*Cin, Cout) matching im2col (kh, kw, cin) order."""
    cout = w_oihw.shape[0]
    return jnp.transpose(w_oihw, (2, 3, 1, 0)).reshape(-1, cout)


def fold_bn_scale_bias(bn):
    s = bn["gamma"] / jnp.sqrt(bn["var"] + BN_EPS)
    b = bn["beta"] - bn["mean"] * s
    return s, b


# ----------------------------------------------------------------------------
# BasicBlock forward
# ----------------------------------------------------------------------------
def basic_block_forward(x_nchw, params, stride):
    # NCHW <-> NHWC only at the block boundary (a full ResNet stack should
    # stay NHWC end-to-end; kept to match the PyTorch module interface).
    x = jnp.transpose(x_nchw, (0, 2, 3, 1)).astype(jnp.float32)
    N, H, W, cin = x.shape
    planes = params["w1"].shape[0]

    # conv1 (3x3 / stride) + bn1 + relu
    s1, b1 = fold_bn_scale_bias(params["bn1"])
    w1 = torch_conv3x3_weight_to_matrix(params["w1"]) * s1[None, :]
    p1, (N, Ho, Wo) = im2col_3x3(x, stride)
    out1 = fused_gemm_bn(p1, w1, b1, relu=True)
    out1_img = out1.reshape(N, Ho, Wo, planes)

    # conv2 (3x3 / 1) + bn2 + shortcut + relu, in a single fused kernel
    s2, b2 = fold_bn_scale_bias(params["bn2"])
    w2 = torch_conv3x3_weight_to_matrix(params["w2"]) * s2[None, :]
    p2, _ = im2col_3x3(out1_img, 1)

    if stride != 1 or cin != planes:
        # 1x1 / stride conv + bn shortcut fused into the conv2 GEMM.
        ss, bs = fold_bn_scale_bias(params["bns"])
        ws = jnp.transpose(params["ws"], (2, 3, 1, 0)).reshape(cin, planes)
        ws = ws * ss[None, :]
        xs = x[:, ::stride, ::stride, :].reshape(N * Ho * Wo, cin)
        out = fused_gemm_bn(p2, w2, b2 + bs, shortcut=(xs, ws), relu=True)
    else:
        res = x.reshape(N * H * W, cin)
        out = fused_gemm_bn(p2, w2, b2, residual=res, relu=True)

    return out.reshape(N, Ho, Wo, planes).transpose(0, 3, 1, 2)   # -> NCHW


# ----------------------------------------------------------------------------
# Pure-JAX reference (lax.conv) for correctness check
# ----------------------------------------------------------------------------
def _conv_ref(x, w, stride, pad):
    return jax.lax.conv_general_dilated(
        x, w, (stride, stride), ((pad, pad), (pad, pad)),
        dimension_numbers=("NCHW", "OIHW", "NCHW"))


def _bn_ref(x, bn):
    s = bn["gamma"] / jnp.sqrt(bn["var"] + BN_EPS)
    b = bn["beta"] - bn["mean"] * s
    return x * s[None, :, None, None] + b[None, :, None, None]


def basic_block_ref(x, params, stride, cin, planes):
    out = jax.nn.relu(_bn_ref(_conv_ref(x, params["w1"], stride, 1), params["bn1"]))
    out = _bn_ref(_conv_ref(out, params["w2"], 1, 1), params["bn2"])
    if stride != 1 or cin != planes:
        sc = _bn_ref(_conv_ref(x, params["ws"], stride, 0), params["bns"])
    else:
        sc = x
    return jax.nn.relu(out + sc)


# ----------------------------------------------------------------------------
def make_params(key, in_planes, planes, stride):
    ks = jax.random.split(key, 12)

    def bn_params(k0, k1, k2, k3, c):
        return dict(
            gamma=0.5 + jax.random.uniform(k0, (c,), jnp.float32),
            beta=0.1 * jax.random.normal(k1, (c,), jnp.float32),
            mean=0.1 * jax.random.normal(k2, (c,), jnp.float32),
            var=0.5 + jax.random.uniform(k3, (c,), jnp.float32),
        )

    params = dict(
        w1=0.1 * jax.random.normal(ks[0], (planes, in_planes, 3, 3), jnp.float32),
        bn1=bn_params(ks[1], ks[2], ks[3], ks[4], planes),
        w2=0.1 * jax.random.normal(ks[5], (planes, planes, 3, 3), jnp.float32),
        bn2=bn_params(ks[6], ks[7], ks[8], ks[9], planes),
    )
    if stride != 1 or in_planes != planes:
        kk = jax.random.split(ks[10], 5)
        params["ws"] = 0.1 * jax.random.normal(kk[0], (planes, in_planes, 1, 1), jnp.float32)
        params["bns"] = bn_params(kk[1], kk[2], kk[3], kk[4], planes)
    return params


if __name__ == "__main__":
    key = jax.random.PRNGKey(0)

    # Case 1: downsampling block (stride 2, channel expansion) -> fused 1x1 shortcut.
    # Case 2: identity block (stride 1, same planes) -> residual-add path.
    cases = [
        dict(in_planes=4, planes=8, stride=2, N=2, H=16, W=16),
        dict(in_planes=8, planes=8, stride=1, N=2, H=16, W=16),
    ]
    for cfg in cases:
        key, kx, kp = jax.random.split(key, 3)
        x = jax.random.normal(
            kx, (cfg["N"], cfg["in_planes"], cfg["H"], cfg["W"]), jnp.float32)
        params = make_params(kp, cfg["in_planes"], cfg["planes"], cfg["stride"])

        fwd = jax.jit(functools.partial(basic_block_forward, stride=cfg["stride"]))
        out = jax.block_until_ready(fwd(x, params))

        ref = basic_block_ref(x, params, cfg["stride"], cfg["in_planes"], cfg["planes"])
        Ho = (cfg["H"] - 1) // cfg["stride"] + 1
        assert out.shape == ref.shape == (cfg["N"], cfg["planes"], Ho, Ho)
        # bf16 MXU inputs (f32 accumulation) -> looser tolerance than pure f32.
        assert jnp.allclose(out, ref, atol=5e-2, rtol=5e-2), \
            f"max abs err {jnp.max(jnp.abs(out - ref))}"

    print("KERNEL_OK")
</pallas_src>

<mosaic_0001>
module attributes {stable_mosaic.version = 11 : i64} {
  func.func @_fused_gemm_kernel(%arg0: i32, %arg1: i32, %arg2: i32, %arg3: memref<128x128xbf16, #tpu.memory_space<vmem>>, %arg4: memref<128x128xbf16, #tpu.memory_space<vmem>>, %arg5: memref<1x128xf32, #tpu.memory_space<vmem>>, %arg6: memref<128x128xf32, #tpu.memory_space<vmem>>, %arg7: memref<128x128xf32, #tpu.memory_space<vmem>>) attributes {dimension_semantics = [#tpu.dimension_semantics<parallel>, #tpu.dimension_semantics<parallel>, #tpu.dimension_semantics<arbitrary>], iteration_bounds = array<i64: 1, 1, 1>, scalar_prefetch = 0 : i64, scratch_operands = 1 : i64, tpu.core_type = #tpu.core_type<tc>, window_params = [{transform_indices = @transform_0, window_bounds = array<i64: 128, 128>}, {transform_indices = @transform_1, window_bounds = array<i64: 128, 128>}, {transform_indices = @transform_2, window_bounds = array<i64: 1, 128>}, {transform_indices = @transform_3, window_bounds = array<i64: 128, 128>}]} {
    %c0_i32 = arith.constant 0 : i32
    %0 = arith.cmpi eq, %arg2, %c0_i32 : i32
    %1 = arith.extui %0 : i1 to i32
    %c0_i32_0 = arith.constant 0 : i32
    %2 = arith.cmpi ne, %1, %c0_i32_0 : i32
    scf.if %2 {
      %cst_10 = arith.constant 0.000000e+00 : f32
      %12 = vector.broadcast %cst_10 : f32 to vector<128x128xf32>
      %c0_11 = arith.constant 0 : index
      %c0_12 = arith.constant 0 : index
      %13 = vector.load %arg7[%c0_11, %c0_12] : memref<128x128xf32, #tpu.memory_space<vmem>>, vector<128x128xf32>
      tpu.vector_store %arg7[%c0_11, %c0_12], %12 {strides = array<i32>} : memref<128x128xf32, #tpu.memory_space<vmem>>, vector<128x128xf32>,
    } else {
    }
    %c0 = arith.constant 0 : index
    %c0_1 = arith.constant 0 : index
    %3 = vector.load %arg7[%c0, %c0_1] : memref<128x128xf32, #tpu.memory_space<vmem>>, vector<128x128xf32>
    %c0_2 = arith.constant 0 : index
    %c0_3 = arith.constant 0 : index
    %4 = vector.load %arg3[%c0_2, %c0_3] : memref<128x128xbf16, #tpu.memory_space<vmem>>, vector<128x128xbf16>
    %c0_4 = arith.constant 0 : index
    %c0_5 = arith.constant 0 : index
    %5 = vector.load %arg4[%c0_4, %c0_5] : memref<128x128xbf16, #tpu.memory_space<vmem>>, vector<128x128xbf16>
    %cst = arith.constant dense<0.000000e+00> : vector<128x128xf32>
    %6 = tpu.matmul %4, %5, %cst {dimension_numbers = #tpu.dot_dimension_numbers<[1], [0], [0], [1], [0, 0, 1, 1], [], []>} : vector<128x128xbf16>, vector<128x128xbf16>, vector<128x128xf32> -> vector<128x128xf32>
    %7 = arith.addf %3, %6 : vector<128x128xf32>
    %c0_6 = arith.constant 0 : index
    %c0_7 = arith.constant 0 : index
    %8 = vector.load %arg7[%c0_6, %c0_7] : memref<128x128xf32, #tpu.memory_space<vmem>>, vector<128x128xf32>
    tpu.vector_store %arg7[%c0_6, %c0_7], %7 {strides = array<i32>} : memref<128x128xf32, #tpu.memory_space<vmem>>, vector<128x128xf32>,
    %c0_i32_8 = arith.constant 0 : i32
    %9 = arith.cmpi eq, %arg2, %c0_i32_8 : i32
    %10 = arith.extui %9 : i1 to i32
    %c0_i32_9 = arith.constant 0 : i32
    %11 = arith.cmpi ne, %10, %c0_i32_9 : i32
    scf.if %11 {
      %c0_10 = arith.constant 0 : index
      %c0_11 = arith.constant 0 : index
      %12 = vector.load %arg7[%c0_10, %c0_11] : memref<128x128xf32, #tpu.memory_space<vmem>>, vector<128x128xf32>
      %c0_12 = arith.constant 0 : index
      %c0_13 = arith.constant 0 : index
      %13 = vector.load %arg5[%c0_12, %c0_13] : memref<1x128xf32, #tpu.memory_space<vmem>>, vector<1x128xf32>
      %14 = vector.broadcast %13 : vector<1x128xf32> to vector<128x128xf32>
      %15 = arith.addf %12, %14 : vector<128x128xf32>
      %cst_14 = arith.constant 0.000000e+00 : f32
      %16 = vector.broadcast %cst_14 : f32 to vector<128x128xf32>
      %17 = arith.maximumf %15, %16 : vector<128x128xf32>
      %c0_15 = arith.constant 0 : index
      %c0_16 = arith.constant 0 : index
      %18 = vector.load %arg6[%c0_15, %c0_16] : memref<128x128xf32, #tpu.memory_space<vmem>>, vector<128x128xf32>
      tpu.vector_store %arg6[%c0_15, %c0_16], %17 {strides = array<i32>} : memref<128x128xf32, #tpu.memory_space<vmem>>, vector<128x128xf32>,
    } else {
    }
    return
  }
  func.func @transform_0(%arg0: i32, %arg1: i32, %arg2: i32) -> (i32, i32) {
    %c0_i32 = arith.constant 0 : i32
    return %arg0, %arg2 : i32, i32
  }
  func.func @transform_1(%arg0: i32, %arg1: i32, %arg2: i32) -> (i32, i32) {
    %c0_i32 = arith.constant 0 : i32
    return %arg2, %arg1 : i32, i32
  }
  func.func @transform_2(%arg0: i32, %arg1: i32, %arg2: i32) -> (i32, i32) {
    %c0_i32 = arith.constant 0 : i32
    %c0_i32_0 = arith.constant 0 : i32
    return %c0_i32, %arg1 : i32, i32
  }
  func.func @transform_3(%arg0: i32, %arg1: i32, %arg2: i32) -> (i32, i32) {
    %c0_i32 = arith.constant 0 : i32
    return %arg0, %arg1 : i32, i32
  }
}

module attributes {stable_mosaic.version = 11 : i64} {
  func.func @_fused_gemm_kernel(%arg0: i32, %arg1: i32, %arg2: i32, %arg3: memref<128x128xbf16, #tpu.memory_space<vmem>>, %arg4: memref<128x128xbf16, #tpu.memory_space<vmem>>, %arg5: memref<1x128xf32, #tpu.memory_space<vmem>>, %arg6: memref<128x128xbf16, #tpu.memory_space<vmem>>, %arg7: memref<128x128xbf16, #tpu.memory_space<vmem>>, %arg8: memref<128x128xf32, #tpu.memory_space<vmem>>, %arg9: memref<128x128xf32, #tpu.memory_space<vmem>>) attributes {dimension_semantics = [#tpu.dimension_semantics<parallel>, #tpu.dimension_semantics<parallel>, #tpu.dimension_semantics<arbitrary>], iteration_bounds = array<i64: 1, 1, 1>, scalar_prefetch = 0 : i64, scratch_operands = 1 : i64, tpu.core_type = #tpu.core_type<tc>, window_params = [{transform_indices = @transform_0, window_bounds = array<i64: 128, 128>}, {transform_indices = @transform_1, window_bounds = array<i64: 128, 128>}, {transform_indices = @transform_2, window_bounds = array<i64: 1, 128>}, {transform_indices = @transform_3, window_bounds = array<i64: 128, 128>}, {transform_indices = @transform_4, window_bounds = array<i64: 128, 128>}, {transform_indices = @transform_5, window_bounds = array<i64: 128, 128>}]} {
    %c0_i32 = arith.constant 0 : i32
    %0 = arith.cmpi eq, %arg2, %c0_i32 : i32
    %1 = arith.extui %0 : i1 to i32
    %c0_i32_0 = arith.constant 0 : i32
    %2 = arith.cmpi ne, %1, %c0_i32_0 : i32
    scf.if %2 {
      %cst_12 = arith.constant 0.000000e+00 : f32
      %15 = vector.broadcast %cst_12 : f32 to vector<128x128xf32>
      %c0_13 = arith.constant 0 : index
      %c0_14 = arith.constant 0 : index
      %16 = vector.load %arg9[%c0_13, %c0_14] : memref<128x128xf32, #tpu.memory_space<vmem>>, vector<128x128xf32>
      tpu.vector_store %arg9[%c0_13, %c0_14], %15 {strides = array<i32>} : memref<128x128xf32, #tpu.memory_space<vmem>>, vector<128x128xf32>,
    } else {
    }
    %c0 = arith.constant 0 : index
    %c0_1 = arith.constant 0 : index
    %3 = vector.load %arg9[%c0, %c0_1] : memref<128x128xf32, #tpu.memory_space<vmem>>, vector<128x128xf32>
    %c0_2 = arith.constant 0 : index
    %c0_3 = arith.constant 0 : index
    %4 = vector.load %arg3[%c0_2, %c0_3] : memref<128x128xbf16, #tpu.memory_space<vmem>>, vector<128x128xbf16>
    %c0_4 = arith.constant 0 : index
    %c0_5 = arith.constant 0 : index
    %5 = vector.load %arg4[%c0_4, %c0_5] : memref<128x128xbf16, #tpu.memory_space<vmem>>, vector<128x128xbf16>
    %cst = arith.constant dense<0.000000e+00> : vector<128x128xf32>
    %6 = tpu.matmul %4, %5, %cst {dimension_numbers = #tpu.dot_dimension_numbers<[1], [0], [0], [1], [0, 0, 1, 1], [], []>} : vector<128x128xbf16>, vector<128x128xbf16>, vector<128x128xf32> -> vector<128x128xf32>
    %7 = arith.addf %3, %6 : vector<128x128xf32>
    %c0_6 = arith.constant 0 : index
    %c0_7 = arith.constant 0 : index
    %8 = vector.load %arg9[%c0_6, %c0_7] : memref<128x128xf32, #tpu.memory_space<vmem>>, vector<128x128xf32>
    tpu.vector_store %arg9[%c0_6, %c0_7], %7 {strides = array<i32>} : memref<128x128xf32, #tpu.memory_space<vmem>>, vector<128x128xf32>,
    %c0_i32_8 = arith.constant 0 : i32
    %9 = arith.cmpi eq, %arg2, %c0_i32_8 : i32
    %10 = arith.extui %9 : i1 to i32
    %c0_i32_9 = arith.constant 0 : i32
    %11 = arith.cmpi ne, %10, %c0_i32_9 : i32
    scf.if %11 {
      %c0_12 = arith.constant 0 : index
      %c0_13 = arith.constant 0 : index
      %15 = vector.load %arg9[%c0_12, %c0_13] : memref<128x128xf32, #tpu.memory_space<vmem>>, vector<128x128xf32>
      %c0_14 = arith.constant 0 : index
      %c0_15 = arith.constant 0 : index
      %16 = vector.load %arg6[%c0_14, %c0_15] : memref<128x128xbf16, #tpu.memory_space<vmem>>, vector<128x128xbf16>
      %c0_16 = arith.constant 0 : index
      %c0_17 = arith.constant 0 : index
      %17 = vector.load %arg7[%c0_16, %c0_17] : memref<128x128xbf16, #tpu.memory_space<vmem>>, vector<128x128xbf16>
      %cst_18 = arith.constant dense<0.000000e+00> : vector<128x128xf32>
      %18 = tpu.matmul %16, %17, %cst_18 {dimension_numbers = #tpu.dot_dimension_numbers<[1], [0], [0], [1], [0, 0, 1, 1], [], []>} : vector<128x128xbf16>, vector<128x128xbf16>, vector<128x128xf32> -> vector<128x128xf32>
      %19 = arith.addf %15, %18 : vector<128x128xf32>
      %c0_19 = arith.constant 0 : index
      %c0_20 = arith.constant 0 : index
      %20 = vector.load %arg9[%c0_19, %c0_20] : memref<128x128xf32, #tpu.memory_space<vmem>>, vector<128x128xf32>
      tpu.vector_store %arg9[%c0_19, %c0_20], %19 {strides = array<i32>} : memref<128x128xf32, #tpu.memory_space<vmem>>, vector<128x128xf32>,
    } else {
    }
    %c0_i32_10 = arith.constant 0 : i32
    %12 = arith.cmpi eq, %arg2, %c0_i32_10 : i32
    %13 = arith.extui %12 : i1 to i32
    %c0_i32_11 = arith.constant 0 : i32
    %14 = arith.cmpi ne, %13, %c0_i32_11 : i32
    scf.if %14 {
      %c0_12 = arith.constant 0 : index
      %c0_13 = arith.constant 0 : index
      %15 = vector.load %arg9[%c0_12, %c0_13] : memref<128x128xf32, #tpu.memory_space<vmem>>, vector<128x128xf32>
      %c0_14 = arith.constant 0 : index
      %c0_15 = arith.constant 0 : index
      %16 = vector.load %arg5[%c0_14, %c0_15] : memref<1x128xf32, #tpu.memory_space<vmem>>, vector<1x128xf32>
      %17 = vector.broadcast %16 : vector<1x128xf32> to vector<128x128xf32>
      %18 = arith.addf %15, %17 : vector<128x128xf32>
      %cst_16 = arith.constant 0.000000e+00 : f32
      %19 = vector.broadcast %cst_16 : f32 to vector<128x128xf32>
      %20 = arith.maximumf %18, %19 : vector<128x128xf32>
      %c0_17 = arith.constant 0 : index
      %c0_18 = arith.constant 0 : index
      %21 = vector.load %arg8[%c0_17, %c0_18] : memref<128x128xf32, #tpu.memory_space<vmem>>, vector<128x128xf32>
      tpu.vector_store %arg8[%c0_17, %c0_18], %20 {strides = array<i32>} : memref<128x128xf32, #tpu.memory_space<vmem>>, vector<128x128xf32>,
    } else {
    }
    return
  }
  func.func @transform_0(%arg0: i32, %arg1: i32, %arg2: i32) -> (i32, i32) {
    %c0_i32 = arith.constant 0 : i32
    return %arg0, %arg2 : i32, i32
  }
  func.func @transform_1(%arg0: i32, %arg1: i32, %arg2: i32) -> (i32, i32) {
    %c0_i32 = arith.constant 0 : i32
    return %arg2, %arg1 : i32, i32
  }
  func.func @transform_2(%arg0: i32, %arg1: i32, %arg2: i32) -> (i32, i32) {
    %c0_i32 = arith.constant 0 : i32
    %c0_i32_0 = arith.constant 0 : i32
    return %c0_i32, %arg1 : i32, i32
  }
  func.func @transform_3(%arg0: i32, %arg1: i32, %arg2: i32) -> (i32, i32) {
    %c0_i32 = arith.constant 0 : i32
    %c0_i32_0 = arith.constant 0 : i32
    return %arg0, %c0_i32 : i32, i32
  }
  func.func @transform_4(%arg0: i32, %arg1: i32, %arg2: i32) -> (i32, i32) {
    %c0_i32 = arith.constant 0 : i32
    %c0_i32_0 = arith.constant 0 : i32
    return %c0_i32, %arg1 : i32, i32
  }
  func.func @transform_5(%arg0: i32, %arg1: i32, %arg2: i32) -> (i32, i32) {
    %c0_i32 = arith.constant 0 : i32
    return %arg0, %arg1 : i32, i32
  }
}

</mosaic_0001>

<llo_original>
// kernel: basic_block_forward.2
$region0: #{basic_block_forward.2}
  #allocation0 [shape = 'u32[]', space=smem, size = 0x4, offset = 0x4, fixed_abs, tag = 'smem constant byte address 0x4 - core index']
  #allocation1 [shape = 'u32[72,128]{1,0:T(1,128)}', space=vmem, size = 0x9000, scoped, tag = 'internal scratch']
  #allocation2 [shape = 'f32[128,128]{1,0:T(8,128)}', space=vmem, size = 0x10000, scoped, tag = 'scratch operand']
  %s0 = inlined_call_operand.vmem [shape: bf16[128,128], index: 0, kind: input, shape index: {}]
  %s1 = inlined_call_operand.vmem [shape: bf16[128,128], index: 1, kind: input, shape index: {}]
  %s2 = inlined_call_operand.vmem [shape: f32[1,128], index: 2, kind: input, shape index: {}]
  %s3 = inlined_call_operand.vmem [shape: f32[128,128], index: 3, kind: output, shape index: {}]
  %s4 = sld [smem:[#allocation0]]
  $region30: #{basic_block_forward.2} parent=0
    _
  %s6 = ssub.s32 1, %s4
  %s7 = scalar_select 0, %s6, %s4
  // Predicated region
  $region2: #{basic_block_forward.2} parent=0 // pred_check
    _
  $region3: #{basic_block_forward.2} parent=0 // pred_check_branch
    %9 = sbr.rel (0) target = $region5
  $region4: #{basic_block_forward.2} parent=0 // pred_region
    _
  $region5: #{basic_block_forward.2} parent=0 // pred_fallthru
    _
  // Predicated region
  $region6: #{basic_block_forward.2} parent=0 // pred_check
    _
  $region7: #{basic_block_forward.2} parent=0 // pred_check_branch
    %11 = sbr.rel (0) target = $region9
  $region8: #{basic_block_forward.2} parent=0 // pred_region
    _
  $region9: #{basic_block_forward.2} parent=0 // pred_fallthru
    _
  // Predicated region
  $region10: #{basic_block_forward.2} parent=0 // pred_check
    _
  $region11: #{basic_block_forward.2} parent=0 // pred_check_branch
    %13 = sbr.rel (0) target = $region13
  $region12: #{basic_block_forward.2} parent=0 // pred_region
    _
  $region13: #{basic_block_forward.2} parent=0 // pred_fallthru
    _
  %p14 = scmp.eq.s32.totalorder 0, 0
  // Predicated region
  $region14: #{basic_block_forward.2} parent=0 // pred_check
    %p15 = pneg %p14
  $region15: #{basic_block_forward.2} parent=0 // pred_check_branch
    %17 = sbr.rel (%p15) target = $region17
  $region16: #{basic_block_forward.2} parent=0 // pred_region
    %18 = vst [vmem:[#allocation2] sm:$0xff] 0.0
    %19 = vst [vmem:[#allocation2 + $0x8] sm:$0xff] 0.0
    %20 = vst [vmem:[#allocation2 + $0x10] sm:$0xff] 0.0
    %21 = vst [vmem:[#allocation2 + $0x18] sm:$0xff] 0.0
    %22 = vst [vmem:[#allocation2 + $0x20] sm:$0xff] 0.0
    %23 = vst [vmem:[#allocation2 + $0x28] sm:$0xff] 0.0
    %24 = vst [vmem:[#allocation2 + $0x30] sm:$0xff] 0.0
    %25 = vst [vmem:[#allocation2 + $0x38] sm:$0xff] 0.0
    %26 = vst [vmem:[#allocation2 + $0x40] sm:$0xff] 0.0
    %27 = vst [vmem:[#allocation2 + $0x48] sm:$0xff] 0.0
    %28 = vst [vmem:[#allocation2 + $0x50] sm:$0xff] 0.0
    %29 = vst [vmem:[#allocation2 + $0x58] sm:$0xff] 0.0
    %30 = vst [vmem:[#allocation2 + $0x60] sm:$0xff] 0.0
    %31 = vst [vmem:[#allocation2 + $0x68] sm:$0xff] 0.0
    %32 = vst [vmem:[#allocation2 + $0x70] sm:$0xff] 0.0
    %33 = vst [vmem:[#allocation2 + $0x78] sm:$0xff] 0.0
  $region17: #{basic_block_forward.2} parent=0 // pred_fallthru
    _
  %v34 = vld [vmem:[#allocation2] sm:$0xff]
  %v35 = vld [vmem:[#allocation2 + $0x8] sm:$0xff]
  %v36 = vld [vmem:[#allocation2 + $0x10] sm:$0xff]
  %v37 = vld [vmem:[#allocation2 + $0x18] sm:$0xff]
  %v38 = vld [vmem:[#allocation2 + $0x20] sm:$0xff]
  %v39 = vld [vmem:[#allocation2 + $0x28] sm:$0xff]
  %v40 = vld [vmem:[#allocation2 + $0x30] sm:$0xff]
  %v41 = vld [vmem:[#allocation2 + $0x38] sm:$0xff]
  %v42 = vld [vmem:[#allocation2 + $0x40] sm:$0xff]
  %v43 = vld [vmem:[#allocation2 + $0x48] sm:$0xff]
  %v44 = vld [vmem:[#allocation2 + $0x50] sm:$0xff]
  %v45 = vld [vmem:[#allocation2 + $0x58] sm:$0xff]
  %v46 = vld [vmem:[#allocation2 + $0x60] sm:$0xff]
  %v47 = vld [vmem:[#allocation2 + $0x68] sm:$0xff]
  %v48 = vld [vmem:[#allocation2 + $0x70] sm:$0xff]
  %v49 = vld [vmem:[#allocation2 + $0x78] sm:$0xff]
  %v50 = vld [vmem:[%s0] sm:$0xf]
  %v51 = vld [vmem:[%s0 + $0x4] sm:$0xf]
  %v52 = vld [vmem:[%s0 + $0x8] sm:$0xf]
  %v53 = vld [vmem:[%s0 + $0xc] sm:$0xf]
  %v54 = vld [vmem:[%s0 + $0x10] sm:$0xf]
  %v55 = vld [vmem:[%s0 + $0x14] sm:$0xf]
  %v56 = vld [vmem:[%s0 + $0x18] sm:$0xf]
  %v57 = vld [vmem:[%s0 + $0x1c] sm:$0xf]
  %v58 = vld [vmem:[%s0 + $0x20] sm:$0xf]
  %v59 = vld [vmem:[%s0 + $0x24] sm:$0xf]
  %v60 = vld [vmem:[%s0 + $0x28] sm:$0xf]
  %v61 = vld [vmem:[%s0 + $0x2c] sm:$0xf]
  %v62 = vld [vmem:[%s0 + $0x30] sm:$0xf]
  %v63 = vld [vmem:[%s0 + $0x34] sm:$0xf]
  %v64 = vld [vmem:[%s0 + $0x38] sm:$0xf]
  %v65 = vld [vmem:[%s0 + $0x3c] sm:$0xf]
  %v66 = vld [vmem:[%s1] sm:$0xf]
  %v67 = vld [vmem:[%s1 + $0x4] sm:$0xf]
  %v68 = vld [vmem:[%s1 + $0x8] sm:$0xf]
  %v69 = vld [vmem:[%s1 + $0xc] sm:$0xf]
  %v70 = vld [vmem:[%s1 + $0x10] sm:$0xf]
  %v71 = vld [vmem:[%s1 + $0x14] sm:$0xf]
  %v72 = vld [vmem:[%s1 + $0x18] sm:$0xf]
  %v73 = vld [vmem:[%s1 + $0x1c] sm:$0xf]
  %v74 = vld [vmem:[%s1 + $0x20] sm:$0xf]
  %v75 = vld [vmem:[%s1 + $0x24] sm:$0xf]
  %v76 = vld [vmem:[%s1 + $0x28] sm:$0xf]
  %v77 = vld [vmem:[%s1 + $0x2c] sm:$0xf]
  %v78 = vld [vmem:[%s1 + $0x30] sm:$0xf]
  %v79 = vld [vmem:[%s1 + $0x34] sm:$0xf]
  %v80 = vld [vmem:[%s1 + $0x38] sm:$0xf]
  %v81 = vld [vmem:[%s1 + $0x3c] sm:$0xf]
  %v98 = vunpack.c.l.b16 %v50
  %v99 = vunpack.c.l.b16 %v51
  %v100 = vunpack.c.l.b16 %v52
  %v101 = vunpack.c.l.b16 %v53
  %v102 = vunpack.c.l.b16 %v54
  %v103 = vunpack.c.l.b16 %v55
  %v104 = vunpack.c.l.b16 %v56
  %v105 = vunpack.c.l.b16 %v57
  %v106 = vunpack.c.l.b16 %v58
  %v107 = vunpack.c.l.b16 %v59
  %v108 = vunpack.c.l.b16 %v60
  %v109 = vunpack.c.l.b16 %v61
  %v110 = vunpack.c.l.b16 %v62
  %v111 = vunpack.c.l.b16 %v63
  %v112 = vunpack.c.l.b16 %v64
  %v113 = vunpack.c.l.b16 %v65
  %v114 = vpack.c.b16 %v99, %v98
  %v115 = vpack.c.b16 %v101, %v100
  %v116 = vpack.c.b16 %v103, %v102
  %v117 = vpack.c.b16 %v105, %v104
  %v118 = vpack.c.b16 %v107, %v106
  %v119 = vpack.c.b16 %v109, %v108
  %v120 = vpack.c.b16 %v111, %v110
  %v121 = vpack.c.b16 %v113, %v112
  %v146 = vunpack.c.l.b16 %v66
  %v147 = vunpack.c.l.b16 %v67
  %v148 = vunpack.c.l.b16 %v68
  %v149 = vunpack.c.l.b16 %v69
  %v150 = vunpack.c.l.b16 %v70
  %v151 = vunpack.c.l.b16 %v71
  %v152 = vunpack.c.l.b16 %v72
  %v153 = vunpack.c.l.b16 %v73
  %v154 = vunpack.c.l.b16 %v74
  %v155 = vunpack.c.l.b16 %v75
  %v156 = vunpack.c.l.b16 %v76
  %v157 = vunpack.c.l.b16 %v77
  %v158 = vunpack.c.l.b16 %v78
  %v159 = vunpack.c.l.b16 %v79
  %v160 = vunpack.c.l.b16 %v80
  %v161 = vunpack.c.l.b16 %v81
  %v162 = vpack.c.b16 %v147, %v146
  %v163 = vpack.c.b16 %v149, %v148
  %v164 = vpack.c.b16 %v151, %v150
  %v165 = vpack.c.b16 %v153, %v152
  %v166 = vpack.c.b16 %v155, %v154
  %v167 = vpack.c.b16 %v157, %v156
  %v168 = vpack.c.b16 %v159, %v158
  %v169 = vpack.c.b16 %v161, %v160
  %178 = vmatpush.bf16.msra.mxu0 %v169
  %179 = vmatpush.bf16.msra.mxu0 %v168
  %180 = vmatpush.bf16.msra.mxu0 %v167
  %181 = vmatpush.bf16.msra.mxu0 %v166
  %182 = vmatpush.bf16.msra.mxu0 %v165
  %183 = vmatpush.bf16.msra.mxu0 %v164
  %184 = vmatpush.bf16.msra.mxu0 %v163
  %185 = vmatpush.bf16.msra.mxu0 %v162
  %186 = vmatmul.bf16.gmra.mxu0 %v114
  %v187 = vpop.f32.mrf.mxu0
  %v188 = vadd.f32 0.0, %v187
  %v189 = vpop.f32.mrf.mxu0
  %v190 = vadd.f32 0.0, %v189
  %191 = vmatmul.bf16.gmra.mxu0 %v115
  %v192 = vpop.f32.mrf.mxu0
  %v193 = vadd.f32 0.0, %v192
  %v194 = vpop.f32.mrf.mxu0
  %v195 = vadd.f32 0.0, %v194
  %196 = vmatmul.bf16.gmra.mxu0 %v116
  %v197 = vpop.f32.mrf.mxu0
  %v198 = vadd.f32 0.0, %v197
  %v199 = vpop.f32.mrf.mxu0
  %v200 = vadd.f32 0.0, %v199
  %201 = vmatmul.bf16.gmra.mxu0 %v117
  %v202 = vpop.f32.mrf.mxu0
  %v203 = vadd.f32 0.0, %v202
  %v204 = vpop.f32.mrf.mxu0
  %v205 = vadd.f32 0.0, %v204
  %206 = vmatmul.bf16.gmra.mxu0 %v118
  %v207 = vpop.f32.mrf.mxu0
  %v208 = vadd.f32 0.0, %v207
  %v209 = vpop.f32.mrf.mxu0
  %v210 = vadd.f32 0.0, %v209
  %211 = vmatmul.bf16.gmra.mxu0 %v119
  %v212 = vpop.f32.mrf.mxu0
  %v213 = vadd.f32 0.0, %v212
  %v214 = vpop.f32.mrf.mxu0
  %v215 = vadd.f32 0.0, %v214
  %216 = vmatmul.bf16.gmra.mxu0 %v120
  %v217 = vpop.f32.mrf.mxu0
  %v218 = vadd.f32 0.0, %v217
  %v219 = vpop.f32.mrf.mxu0
  %v220 = vadd.f32 0.0, %v219
  %221 = vmatmul.bf16.gmra.mxu0 %v121
  %v222 = vpop.f32.mrf.mxu0
  %v223 = vadd.f32 0.0, %v222
  %v224 = vpop.f32.mrf.mxu0
  %v225 = vadd.f32 0.0, %v224
  %226 = vdwg.mxu0
  %v227 = vadd.f32 %v34, %v188
  %v228 = vadd.f32 %v35, %v190
  %v229 = vadd.f32 %v36, %v193
  %v230 = vadd.f32 %v37, %v195
  %v231 = vadd.f32 %v38, %v198
  %v232 = vadd.f32 %v39, %v200
  %v233 = vadd.f32 %v40, %v203
  %v234 = vadd.f32 %v41, %v205
  %v235 = vadd.f32 %v42, %v208
  %v236 = vadd.f32 %v43, %v210
  %v237 = vadd.f32 %v44, %v213
  %v238 = vadd.f32 %v45, %v215
  %v239 = vadd.f32 %v46, %v218
  %v240 = vadd.f32 %v47, %v220
  %v241 = vadd.f32 %v48, %v223
  %v242 = vadd.f32 %v49, %v225
  %243 = vst [vmem:[#allocation2] sm:$0xff] %v227
  %244 = vst [vmem:[#allocation2 + $0x8] sm:$0xff] %v228
  %245 = vst [vmem:[#allocation2 + $0x10] sm:$0xff] %v229
  %246 = vst [vmem:[#allocation2 + $0x18] sm:$0xff] %v230
  %247 = vst [vmem:[#allocation2 + $0x20] sm:$0xff] %v231
  %248 = vst [vmem:[#allocation2 + $0x28] sm:$0xff] %v232
  %249 = vst [vmem:[#allocation2 + $0x30] sm:$0xff] %v233
  %250 = vst [vmem:[#allocation2 + $0x38] sm:$0xff] %v234
  %251 = vst [vmem:[#allocation2 + $0x40] sm:$0xff] %v235
  %252 = vst [vmem:[#allocation2 + $0x48] sm:$0xff] %v236
  %253 = vst [vmem:[#allocation2 + $0x50] sm:$0xff] %v237
  %254 = vst [vmem:[#allocation2 + $0x58] sm:$0xff] %v238
  %255 = vst [vmem:[#allocation2 + $0x60] sm:$0xff] %v239
  %256 = vst [vmem:[#allocation2 + $0x68] sm:$0xff] %v240
  %257 = vst [vmem:[#allocation2 + $0x70] sm:$0xff] %v241
  %258 = vst [vmem:[#allocation2 + $0x78] sm:$0xff] %v242
  // Predicated region
  $region18: #{basic_block_forward.2} parent=0 // pred_check
    %p259 = pneg %p14
  $region19: #{basic_block_forward.2} parent=0 // pred_check_branch
    %261 = sbr.rel (%p259) target = $region21
  $region20: #{basic_block_forward.2} parent=0 // pred_region
    %v262 = vld [vmem:[#allocation2] sm:$0xff]
    %v263 = vld [vmem:[#allocation2 + $0x8] sm:$0xff]
    %v264 = vld [vmem:[#allocation2 + $0x10] sm:$0xff]
    %v265 = vld [vmem:[#allocation2 + $0x18] sm:$0xff]
    %v266 = vld [vmem:[#allocation2 + $0x20] sm:$0xff]
    %v267 = vld [vmem:[#allocation2 + $0x28] sm:$0xff]
    %v268 = vld [vmem:[#allocation2 + $0x30] sm:$0xff]
    %v269 = vld [vmem:[#allocation2 + $0x38] sm:$0xff]
    %v270 = vld [vmem:[#allocation2 + $0x40] sm:$0xff]
    %v271 = vld [vmem:[#allocation2 + $0x48] sm:$0xff]
    %v272 = vld [vmem:[#allocation2 + $0x50] sm:$0xff]
    %v273 = vld [vmem:[#allocation2 + $0x58] sm:$0xff]
    %v274 = vld [vmem:[#allocation2 + $0x60] sm:$0xff]
    %v275 = vld [vmem:[#allocation2 + $0x68] sm:$0xff]
    %v276 = vld [vmem:[#allocation2 + $0x70] sm:$0xff]
    %v277 = vld [vmem:[#allocation2 + $0x78] sm:$0xff]
    %v278 = vld [vmem:[%s2] sm:$0x1]
    %v280 = vperm.slane %v278, 0
    %v282 = vadd.f32 %v262, %v280
    %v283 = vadd.f32 %v263, %v280
    %v284 = vadd.f32 %v264, %v280
    %v285 = vadd.f32 %v265, %v280
    %v286 = vadd.f32 %v266, %v280
    %v287 = vadd.f32 %v267, %v280
    %v288 = vadd.f32 %v268, %v280
    %v289 = vadd.f32 %v269, %v280
    %v290 = vadd.f32 %v270, %v280
    %v291 = vadd.f32 %v271, %v280
    %v292 = vadd.f32 %v272, %v280
    %v293 = vadd.f32 %v273, %v280
    %v294 = vadd.f32 %v274, %v280
    %v295 = vadd.f32 %v275, %v280
    %v296 = vadd.f32 %v276, %v280
    %v297 = vadd.f32 %v277, %v280
    %v298 = vmax.f32 %v282, 0.0
    %v299 = vmax.f32 %v283, 0.0
    %v300 = vmax.f32 %v284, 0.0
    %v301 = vmax.f32 %v285, 0.0
    %v302 = vmax.f32 %v286, 0.0
    %v303 = vmax.f32 %v287, 0.0
    %v304 = vmax.f32 %v288, 0.0
    %v305 = vmax.f32 %v289, 0.0
    %v306 = vmax.f32 %v290, 0.0
    %v307 = vmax.f32 %v291, 0.0
    %v308 = vmax.f32 %v292, 0.0
    %v309 = vmax.f32 %v293, 0.0
    %v310 = vmax.f32 %v294, 0.0
    %v311 = vmax.f32 %v295, 0.0
    %v312 = vmax.f32 %v296, 0.0
    %v313 = vmax.f32 %v297, 0.0
    %314 = vst [vmem:[%s3] sm:$0xff] %v298
    %315 = vst [vmem:[%s3 + $0x8] sm:$0xff] %v299
    %316 = vst [vmem:[%s3 + $0x10] sm:$0xff] %v300
    %317 = vst [vmem:[%s3 + $0x18] sm:$0xff] %v301
    %318 = vst [vmem:[%s3 + $0x20] sm:$0xff] %v302
    %319 = vst [vmem:[%s3 + $0x28] sm:$0xff] %v303
    %320 = vst [vmem:[%s3 + $0x30] sm:$0xff] %v304
    %321 = vst [vmem:[%s3 + $0x38] sm:$0xff] %v305
    %322 = vst [vmem:[%s3 + $0x40] sm:$0xff] %v306
    %323 = vst [vmem:[%s3 + $0x48] sm:$0xff] %v307
    %324 = vst [vmem:[%s3 + $0x50] sm:$0xff] %v308
    %325 = vst [vmem:[%s3 + $0x58] sm:$0xff] %v309
    %326 = vst [vmem:[%s3 + $0x60] sm:$0xff] %v310
    %327 = vst [vmem:[%s3 + $0x68] sm:$0xff] %v311
    %328 = vst [vmem:[%s3 + $0x70] sm:$0xff] %v312
    %329 = vst [vmem:[%s3 + $0x78] sm:$0xff] %v313
  $region21: #{basic_block_forward.2} parent=0 // pred_fallthru
    _
  // Predicated region
  $region22: #{basic_block_forward.2} parent=0 // pred_check
    _
  $region23: #{basic_block_forward.2} parent=0 // pred_check_branch
    %331 = sbr.rel (0) target = $region25
  $region24: #{basic_block_forward.2} parent=0 // pred_region
    _
  $region25: #{basic_block_forward.2} parent=0 // pred_fallthru
    _
  // Predicated region
  $region26: #{basic_block_forward.2} parent=0 // pred_check
    _
  $region27: #{basic_block_forward.2} parent=0 // pred_check_branch
    %333 = sbr.rel (0) target = $region29
  $region28: #{basic_block_forward.2} parent=0 // pred_region
    _
  $region29: #{basic_block_forward.2} parent=0 // pred_fallthru
    _

// kernel: basic_block_forward.3
$region0: #{basic_block_forward.3}
  #allocation0 [shape = 'u32[]', space=smem, size = 0x4, offset = 0x4, fixed_abs, tag = 'smem constant byte address 0x4 - core index']
  #allocation1 [shape = 'u32[72,128]{1,0:T(1,128)}', space=vmem, size = 0x9000, scoped, tag = 'internal scratch']
  #allocation2 [shape = 'f32[128,128]{1,0:T(8,128)}', space=vmem, size = 0x10000, scoped, tag = 'scratch operand']
  %s0 = inlined_call_operand.vmem [shape: bf16[128,128], index: 0, kind: input, shape index: {}]
  %s1 = inlined_call_operand.vmem [shape: bf16[128,128], index: 1, kind: input, shape index: {}]
  %s2 = inlined_call_operand.vmem [shape: f32[1,128], index: 2, kind: input, shape index: {}]
  %s3 = inlined_call_operand.vmem [shape: bf16[128,128], index: 3, kind: input, shape index: {}]
  %s4 = inlined_call_operand.vmem [shape: bf16[128,128], index: 4, kind: input, shape index: {}]
  %s5 = inlined_call_operand.vmem [shape: f32[128,128], index: 5, kind: output, shape index: {}]
  %s6 = sld [smem:[#allocation0]]
  $region38: #{basic_block_forward.3} parent=0
    _
  %s8 = ssub.s32 1, %s6
  %s9 = scalar_select 0, %s8, %s6
  // Predicated region
  $region2: #{basic_block_forward.3} parent=0 // pred_check
    _
  $region3: #{basic_block_forward.3} parent=0 // pred_check_branch
    %11 = sbr.rel (0) target = $region5
  $region4: #{basic_block_forward.3} parent=0 // pred_region
    _
  $region5: #{basic_block_forward.3} parent=0 // pred_fallthru
    _
  // Predicated region
  $region6: #{basic_block_forward.3} parent=0 // pred_check
    _
  $region7: #{basic_block_forward.3} parent=0 // pred_check_branch
    %13 = sbr.rel (0) target = $region9
  $region8: #{basic_block_forward.3} parent=0 // pred_region
    _
  $region9: #{basic_block_forward.3} parent=0 // pred_fallthru
    _
  // Predicated region
  $region10: #{basic_block_forward.3} parent=0 // pred_check
    _
  $region11: #{basic_block_forward.3} parent=0 // pred_check_branch
    %15 = sbr.rel (0) target = $region13
  $region12: #{basic_block_forward.3} parent=0 // pred_region
    _
  $region13: #{basic_block_forward.3} parent=0 // pred_fallthru
    _
  // Predicated region
  $region14: #{basic_block_forward.3} parent=0 // pred_check
    _
  $region15: #{basic_block_forward.3} parent=0 // pred_check_branch
    %17 = sbr.rel (0) target = $region17
  $region16: #{basic_block_forward.3} parent=0 // pred_region
    _
  $region17: #{basic_block_forward.3} parent=0 // pred_fallthru
    _
  // Predicated region
  $region18: #{basic_block_forward.3} parent=0 // pred_check
    _
  $region19: #{basic_block_forward.3} parent=0 // pred_check_branch
    %19 = sbr.rel (0) target = $region21
  $region20: #{basic_block_forward.3} parent=0 // pred_region
    _
  $region21: #{basic_block_forward.3} parent=0 // pred_fallthru
    _
  %p20 = scmp.eq.s32.totalorder 0, 0
  // Predicated region
  $region22: #{basic_block_forward.3} parent=0 // pred_check
    %p21 = pneg %p20
  $region23: #{basic_block_forward.3} parent=0 // pred_check_branch
    %23 = sbr.rel (%p21) target = $region25
  $region24: #{basic_block_forward.3} parent=0 // pred_region
    %24 = vst [vmem:[#allocation2] sm:$0xff] 0.0
    %25 = vst [vmem:[#allocation2 + $0x8] sm:$0xff] 0.0
    %26 = vst [vmem:[#allocation2 + $0x10] sm:$0xff] 0.0
    %27 = vst [vmem:[#allocation2 + $0x18] sm:$0xff] 0.0
    %28 = vst [vmem:[#allocation2 + $0x20] sm:$0xff] 0.0
    %29 = vst [vmem:[#allocation2 + $0x28] sm:$0xff] 0.0
    %30 = vst [vmem:[#allocation2 + $0x30] sm:$0xff] 0.0
    %31 = vst [vmem:[#allocation2 + $0x38] sm:$0xff] 0.0
    %32 = vst [vmem:[#allocation2 + $0x40] sm:$0xff] 0.0
    %33 = vst [vmem:[#allocation2 + $0x48] sm:$0xff] 0.0
    %34 = vst [vmem:[#allocation2 + $0x50] sm:$0xff] 0.0
    %35 = vst [vmem:[#allocation2 + $0x58] sm:$0xff] 0.0
    %36 = vst [vmem:[#allocation2 + $0x60] sm:$0xff] 0.0
    %37 = vst [vmem:[#allocation2 + $0x68] sm:$0xff] 0.0
    %38 = vst [vmem:[#allocation2 + $0x70] sm:$0xff] 0.0
    %39 = vst [vmem:[#allocation2 + $0x78] sm:$0xff] 0.0
  $region25: #{basic_block_forward.3} parent=0 // pred_fallthru
    _
  %v40 = vld [vmem:[#allocation2] sm:$0xff]
  %v41 = vld [vmem:[#allocation2 + $0x8] sm:$0xff]
  %v42 = vld [vmem:[#allocation2 + $0x10] sm:$0xff]
  %v43 = vld [vmem:[#allocation2 + $0x18] sm:$0xff]
  %v44 = vld [vmem:[#allocation2 + $0x20] sm:$0xff]
  %v45 = vld [vmem:[#allocation2 + $0x28] sm:$0xff]
  %v46 = vld [vmem:[#allocation2 + $0x30] sm:$0xff]
  %v47 = vld [vmem:[#allocation2 + $0x38] sm:$0xff]
  %v48 = vld [vmem:[#allocation2 + $0x40] sm:$0xff]
  %v49 = vld [vmem:[#allocation2 + $0x48] sm:$0xff]
  %v50 = vld [vmem:[#allocation2 + $0x50] sm:$0xff]
  %v51 = vld [vmem:[#allocation2 + $0x58] sm:$0xff]
  %v52 = vld [vmem:[#allocation2 + $0x60] sm:$0xff]
  %v53 = vld [vmem:[#allocation2 + $0x68] sm:$0xff]
  %v54 = vld [vmem:[#allocation2 + $0x70] sm:$0xff]
  %v55 = vld [vmem:[#allocation2 + $0x78] sm:$0xff]
  %v56 = vld [vmem:[%s0] sm:$0xf]
  %v57 = vld [vmem:[%s0 + $0x4] sm:$0xf]
  %v58 = vld [vmem:[%s0 + $0x8] sm:$0xf]
  %v59 = vld [vmem:[%s0 + $0xc] sm:$0xf]
  %v60 = vld [vmem:[%s0 + $0x10] sm:$0xf]
  %v61 = vld [vmem:[%s0 + $0x14] sm:$0xf]
  %v62 = vld [vmem:[%s0 + $0x18] sm:$0xf]
  %v63 = vld [vmem:[%s0 + $0x1c] sm:$0xf]
  %v64 = vld [vmem:[%s0 + $0x20] sm:$0xf]
  %v65 = vld [vmem:[%s0 + $0x24] sm:$0xf]
  %v66 = vld [vmem:[%s0 + $0x28] sm:$0xf]
  %v67 = vld [vmem:[%s0 + $0x2c] sm:$0xf]
  %v68 = vld [vmem:[%s0 + $0x30] sm:$0xf]
  %v69 = vld [vmem:[%s0 + $0x34] sm:$0xf]
  %v70 = vld [vmem:[%s0 + $0x38] sm:$0xf]
  %v71 = vld [vmem:[%s0 + $0x3c] sm:$0xf]
  %v72 = vld [vmem:[%s1] sm:$0xf]
  %v73 = vld [vmem:[%s1 + $0x4] sm:$0xf]
  %v74 = vld [vmem:[%s1 + $0x8] sm:$0xf]
  %v75 = vld [vmem:[%s1 + $0xc] sm:$0xf]
  %v76 = vld [vmem:[%s1 + $0x10] sm:$0xf]
  %v77 = vld [vmem:[%s1 + $0x14] sm:$0xf]
  %v78 = vld [vmem:[%s1 + $0x18] sm:$0xf]
  %v79 = vld [vmem:[%s1 + $0x1c] sm:$0xf]
  %v80 = vld [vmem:[%s1 + $0x20] sm:$0xf]
  %v81 = vld [vmem:[%s1 + $0x24] sm:$0xf]
  %v82 = vld [vmem:[%s1 + $0x28] sm:$0xf]
  %v83 = vld [vmem:[%s1 + $0x2c] sm:$0xf]
  %v84 = vld [vmem:[%s1 + $0x30] sm:$0xf]
  %v85 = vld [vmem:[%s1 + $0x34] sm:$0xf]
  %v86 = vld [vmem:[%s1 + $0x38] sm:$0xf]
  %v87 = vld [vmem:[%s1 + $0x3c] sm:$0xf]
  %v104 = vunpack.c.l.b16 %v56
  %v105 = vunpack.c.l.b16 %v57
  %v106 = vunpack.c.l.b16 %v58
  %v107 = vunpack.c.l.b16 %v59
  %v108 = vunpack.c.l.b16 %v60
  %v109 = vunpack.c.l.b16 %v61
  %v110 = vunpack.c.l.b16 %v62
  %v111 = vunpack.c.l.b16 %v63
  %v112 = vunpack.c.l.b16 %v64
  %v113 = vunpack.c.l.b16 %v65
  %v114 = vunpack.c.l.b16 %v66
  %v115 = vunpack.c.l.b16 %v67
  %v116 = vunpack.c.l.b16 %v68
  %v117 = vunpack.c.l.b16 %v69
  %v118 = vunpack.c.l.b16 %v70
  %v119 = vunpack.c.l.b16 %v71
  %v120 = vpack.c.b16 %v105, %v104
  %v121 = vpack.c.b16 %v107, %v106
  %v122 = vpack.c.b16 %v109, %v108
  %v123 = vpack.c.b16 %v111, %v110
  %v124 = vpack.c.b16 %v113, %v112
  %v125 = vpack.c.b16 %v115, %v114
  %v126 = vpack.c.b16 %v117, %v116
  %v127 = vpack.c.b16 %v119, %v118
  %v152 = vunpack.c.l.b16 %v72
  %v153 = vunpack.c.l.b16 %v73
  %v154 = vunpack.c.l.b16 %v74
  %v155 = vunpack.c.l.b16 %v75
  %v156 = vunpack.c.l.b16 %v76
  %v157 = vunpack.c.l.b16 %v77
  %v158 = vunpack.c.l.b16 %v78
  %v159 = vunpack.c.l.b16 %v79
  %v160 = vunpack.c.l.b16 %v80
  %v161 = vunpack.c.l.b16 %v81
  %v162 = vunpack.c.l.b16 %v82
  %v163 = vunpack.c.l.b16 %v83
  %v164 = vunpack.c.l.b16 %v84
  %v165 = vunpack.c.l.b16 %v85
  %v166 = vunpack.c.l.b16 %v86
  %v167 = vunpack.c.l.b16 %v87
  %v168 = vpack.c.b16 %v153, %v152
  %v169 = vpack.c.b16 %v155, %v154
  %v170 = vpack.c.b16 %v157, %v156
  %v171 = vpack.c.b16 %v159, %v158
  %v172 = vpack.c.b16 %v161, %v160
  %v173 = vpack.c.b16 %v163, %v162
  %v174 = vpack.c.b16 %v165, %v164
  %v175 = vpack.c.b16 %v167, %v166
  %184 = vmatpush.bf16.msra.mxu0 %v175
  %185 = vmatpush.bf16.msra.mxu0 %v174
  %186 = vmatpush.bf16.msra.mxu0 %v173
  %187 = vmatpush.bf16.msra.mxu0 %v172
  %188 = vmatpush.bf16.msra.mxu0 %v171
  %189 = vmatpush.bf16.msra.mxu0 %v170
  %190 = vmatpush.bf16.msra.mxu0 %v169
  %191 = vmatpush.bf16.msra.mxu0 %v168
  %192 = vmatmul.bf16.gmra.mxu0 %v120
  %v193 = vpop.f32.mrf.mxu0
  %v194 = vadd.f32 0.0, %v193
  %v195 = vpop.f32.mrf.mxu0
  %v196 = vadd.f32 0.0, %v195
  %197 = vmatmul.bf16.gmra.mxu0 %v121
  %v198 = vpop.f32.mrf.mxu0
  %v199 = vadd.f32 0.0, %v198
  %v200 = vpop.f32.mrf.mxu0
  %v201 = vadd.f32 0.0, %v200
  %202 = vmatmul.bf16.gmra.mxu0 %v122
  %v203 = vpop.f32.mrf.mxu0
  %v204 = vadd.f32 0.0, %v203
  %v205 = vpop.f32.mrf.mxu0
  %v206 = vadd.f32 0.0, %v205
  %207 = vmatmul.bf16.gmra.mxu0 %v123
  %v208 = vpop.f32.mrf.mxu0
  %v209 = vadd.f32 0.0, %v208
  %v210 = vpop.f32.mrf.mxu0
  %v211 = vadd.f32 0.0, %v210
  %212 = vmatmul.bf16.gmra.mxu0 %v124
  %v213 = vpop.f32.mrf.mxu0
  %v214 = vadd.f32 0.0, %v213
  %v215 = vpop.f32.mrf.mxu0
  %v216 = vadd.f32 0.0, %v215
  %217 = vmatmul.bf16.gmra.mxu0 %v125
  %v218 = vpop.f32.mrf.mxu0
  %v219 = vadd.f32 0.0, %v218
  %v220 = vpop.f32.mrf.mxu0
  %v221 = vadd.f32 0.0, %v220
  %222 = vmatmul.bf16.gmra.mxu0 %v126
  %v223 = vpop.f32.mrf.mxu0
  %v224 = vadd.f32 0.0, %v223
  %v225 = vpop.f32.mrf.mxu0
  %v226 = vadd.f32 0.0, %v225
  %227 = vmatmul.bf16.gmra.mxu0 %v127
  %v228 = vpop.f32.mrf.mxu0
  %v229 = vadd.f32 0.0, %v228
  %v230 = vpop.f32.mrf.mxu0
  %v231 = vadd.f32 0.0, %v230
  %232 = vdwg.mxu0
  %v233 = vadd.f32 %v40, %v194
  %v234 = vadd.f32 %v41, %v196
  %v235 = vadd.f32 %v42, %v199
  %v236 = vadd.f32 %v43, %v201
  %v237 = vadd.f32 %v44, %v204
  %v238 = vadd.f32 %v45, %v206
  %v239 = vadd.f32 %v46, %v209
  %v240 = vadd.f32 %v47, %v211
  %v241 = vadd.f32 %v48, %v214
  %v242 = vadd.f32 %v49, %v216
  %v243 = vadd.f32 %v50, %v219
  %v244 = vadd.f32 %v51, %v221
  %v245 = vadd.f32 %v52, %v224
  %v246 = vadd.f32 %v53, %v226
  %v247 = vadd.f32 %v54, %v229
  %v248 = vadd.f32 %v55, %v231
  %249 = vst [vmem:[#allocation2] sm:$0xff] %v233
  %250 = vst [vmem:[#allocation2 + $0x8] sm:$0xff] %v234
  %251 = vst [vmem:[#allocation2 + $0x10] sm:$0xff] %v235
  %252 = vst [vmem:[#allocation2 + $0x18] sm:$0xff] %v236
  %253 = vst [vmem:[#allocation2 + $0x20] sm:$0xff] %v237
  %254 = vst [vmem:[#allocation2 + $0x28] sm:$0xff] %v238
  %255 = vst [vmem:[#allocation2 + $0x30] sm:$0xff] %v239
  %256 = vst [vmem:[#allocation2 + $0x38] sm:$0xff] %v240
  %257 = vst [vmem:[#allocation2 + $0x40] sm:$0xff] %v241
  %258 = vst [vmem:[#allocation2 + $0x48] sm:$0xff] %v242
  %259 = vst [vmem:[#allocation2 + $0x50] sm:$0xff] %v243
  %260 = vst [vmem:[#allocation2 + $0x58] sm:$0xff] %v244
  %261 = vst [vmem:[#allocation2 + $0x60] sm:$0xff] %v245
  %262 = vst [vmem:[#allocation2 + $0x68] sm:$0xff] %v246
  %263 = vst [vmem:[#allocation2 + $0x70] sm:$0xff] %v247
  %264 = vst [vmem:[#allocation2 + $0x78] sm:$0xff] %v248
  // Predicated region
  $region26: #{basic_block_forward.3} parent=0 // pred_check
    %p265 = pneg %p20
  $region27: #{basic_block_forward.3} parent=0 // pred_check_branch
    %267 = sbr.rel (%p265) target = $region29
  $region28: #{basic_block_forward.3} parent=0 // pred_region
    %v268 = vld [vmem:[#allocation2] sm:$0xff]
    %v269 = vld [vmem:[#allocation2 + $0x8] sm:$0xff]
    %v270 = vld [vmem:[#allocation2 + $0x10] sm:$0xff]
    %v271 = vld [vmem:[#allocation2 + $0x18] sm:$0xff]
    %v272 = vld [vmem:[#allocation2 + $0x20] sm:$0xff]
    %v273 = vld [vmem:[#allocation2 + $0x28] sm:$0xff]
    %v274 = vld [vmem:[#allocation2 + $0x30] sm:$0xff]
    %v275 = vld [vmem:[#allocation2 + $0x38] sm:$0xff]
    %v276 = vld [vmem:[#allocation2 + $0x40] sm:$0xff]
    %v277 = vld [vmem:[#allocation2 + $0x48] sm:$0xff]
    %v278 = vld [vmem:[#allocation2 + $0x50] sm:$0xff]
    %v279 = vld [vmem:[#allocation2 + $0x58] sm:$0xff]
    %v280 = vld [vmem:[#allocation2 + $0x60] sm:$0xff]
    %v281 = vld [vmem:[#allocation2 + $0x68] sm:$0xff]
    %v282 = vld [vmem:[#allocation2 + $0x70] sm:$0xff]
    %v283 = vld [vmem:[#allocation2 + $0x78] sm:$0xff]
    %v284 = vld [vmem:[%s3] sm:$0xf]
    %v285 = vld [vmem:[%s3 + $0x4] sm:$0xf]
    %v286 = vld [vmem:[%s3 + $0x8] sm:$0xf]
    %v287 = vld [vmem:[%s3 + $0xc] sm:$0xf]
    %v288 = vld [vmem:[%s3 + $0x10] sm:$0xf]
    %v289 = vld [vmem:[%s3 + $0x14] sm:$0xf]
    %v290 = vld [vmem:[%s3 + $0x18] sm:$0xf]
    %v291 = vld [vmem:[%s3 + $0x1c] sm:$0xf]
    %v292 = vld [vmem:[%s3 + $0x20] sm:$0xf]
    %v293 = vld [vmem:[%s3 + $0x24] sm:$0xf]
    %v294 = vld [vmem:[%s3 + $0x28] sm:$0xf]
    %v295 = vld [vmem:[%s3 + $0x2c] sm:$0xf]
    %v296 = vld [vmem:[%s3 + $0x30] sm:$0xf]
    %v297 = vld [vmem:[%s3 + $0x34] sm:$0xf]
    %v298 = vld [vmem:[%s3 + $0x38] sm:$0xf]
    %v299 = vld [vmem:[%s3 + $0x3c] sm:$0xf]
    %v300 = vld [vmem:[%s4] sm:$0xf]
    %v301 = vld [vmem:[%s4 + $0x4] sm:$0xf]
    %v302 = vld [vmem:[%s4 + $0x8] sm:$0xf]
    %v303 = vld [vmem:[%s4 + $0xc] sm:$0xf]
    %v304 = vld [vmem:[%s4 + $0x10] sm:$0xf]
    %v305 = vld [vmem:[%s4 + $0x14] sm:$0xf]
    %v306 = vld [vmem:[%s4 + $0x18] sm:$0xf]
    %v307 = vld [vmem:[%s4 + $0x1c] sm:$0xf]
    %v308 = vld [vmem:[%s4 + $0x20] sm:$0xf]
    %v309 = vld [vmem:[%s4 + $0x24] sm:$0xf]
    %v310 = vld [vmem:[%s4 + $0x28] sm:$0xf]
    %v311 = vld [vmem:[%s4 + $0x2c] sm:$0xf]
    %v312 = vld [vmem:[%s4 + $0x30] sm:$0xf]
    %v313 = vld [vmem:[%s4 + $0x34] sm:$0xf]
    %v314 = vld [vmem:[%s4 + $0x38] sm:$0xf]
    %v315 = vld [vmem:[%s4 + $0x3c] sm:$0xf]
    %v332 = vunpack.c.l.b16 %v284
    %v333 = vunpack.c.l.b16 %v285
    %v334 = vunpack.c.l.b16 %v286
    %v335 = vunpack.c.l.b16 %v287
    %v336 = vunpack.c.l.b16 %v288
    %v337 = vunpack.c.l.b16 %v289
    %v338 = vunpack.c.l.b16 %v290
    %v339 = vunpack.c.l.b16 %v291
    %v340 = vunpack.c.l.b16 %v292
    %v341 = vunpack.c.l.b16 %v293
    %v342 = vunpack.c.l.b16 %v294
    %v343 = vunpack.c.l.b16 %v295
    %v344 = vunpack.c.l.b16 %v296
    %v345 = vunpack.c.l.b16 %v297
    %v346 = vunpack.c.l.b16 %v298
    %v347 = vunpack.c.l.b16 %v299
    %v348 = vpack.c.b16 %v333, %v332
    %v349 = vpack.c.b16 %v335, %v334
    %v350 = vpack.c.b16 %v337, %v336
    %v351 = vpack.c.b16 %v339, %v338
    %v352 = vpack.c.b16 %v341, %v340
    %v353 = vpack.c.b16 %v343, %v342
    %v354 = vpack.c.b16 %v345, %v344
    %v355 = vpack.c.b16 %v347, %v346
    %v380 = vunpack.c.l.b16 %v300
    %v381 = vunpack.c.l.b16 %v301
    %v382 = vunpack.c.l.b16 %v302
    %v383 = vunpack.c.l.b16 %v303
    %v384 = vunpack.c.l.b16 %v304
    %v385 = vunpack.c.l.b16 %v305
    %v386 = vunpack.c.l.b16 %v306
    %v387 = vunpack.c.l.b16 %v307
    %v388 = vunpack.c.l.b16 %v308
    %v389 = vunpack.c.l.b16 %v309
    %v390 = vunpack.c.l.b16 %v310
    %v391 = vunpack.c.l.b16 %v311
    %v392 = vunpack.c.l.b16 %v312
    %v393 = vunpack.c.l.b16 %v313
    %v394 = vunpack.c.l.b16 %v314
    %v395 = vunpack.c.l.b16 %v315
    %v396 = vpack.c.b16 %v381, %v380
    %v397 = vpack.c.b16 %v383, %v382
    %v398 = vpack.c.b16 %v385, %v384
    %v399 = vpack.c.b16 %v387, %v386
    %v400 = vpack.c.b16 %v389, %v388
    %v401 = vpack.c.b16 %v391, %v390
    %v402 = vpack.c.b16 %v393, %v392
    %v403 = vpack.c.b16 %v395, %v394
    %412 = vmatpush.bf16.msra.mxu0 %v403
    %413 = vmatpush.bf16.msra.mxu0 %v402
    %414 = vmatpush.bf16.msra.mxu0 %v401
    %415 = vmatpush.bf16.msra.mxu0 %v400
    %416 = vmatpush.bf16.msra.mxu0 %v399
    %417 = vmatpush.bf16.msra.mxu0 %v398
    %418 = vmatpush.bf16.msra.mxu0 %v397
    %419 = vmatpush.bf16.msra.mxu0 %v396
    %420 = vmatmul.bf16.gmra.mxu0 %v348
    %v421 = vpop.f32.mrf.mxu0
    %v422 = vadd.f32 0.0, %v421
    %v423 = vpop.f32.mrf.mxu0
    %v424 = vadd.f32 0.0, %v423
    %425 = vmatmul.bf16.gmra.mxu0 %v349
    %v426 = vpop.f32.mrf.mxu0
    %v427 = vadd.f32 0.0, %v426
    %v428 = vpop.f32.mrf.mxu0
    %v429 = vadd.f32 0.0, %v428
    %430 = vmatmul.bf16.gmra.mxu0 %v350
    %v431 = vpop.f32.mrf.mxu0
    %v432 = vadd.f32 0.0, %v431
    %v433 = vpop.f32.mrf.mxu0
    %v434 = vadd.f32 0.0, %v433
    %435 = vmatmul.bf16.gmra.mxu0 %v351
    %v436 = vpop.f32.mrf.mxu0
    %v437 = vadd.f32 0.0, %v436
    %v438 = vpop.f32.mrf.mxu0
    %v439 = vadd.f32 0.0, %v438
    %440 = vmatmul.bf16.gmra.mxu0 %v352
    %v441 = vpop.f32.mrf.mxu0
    %v442 = vadd.f32 0.0, %v441
    %v443 = vpop.f32.mrf.mxu0
    %v444 = vadd.f32 0.0, %v443
    %445 = vmatmul.bf16.gmra.mxu0 %v353
    %v446 = vpop.f32.mrf.mxu0
    %v447 = vadd.f32 0.0, %v446
    %v448 = vpop.f32.mrf.mxu0
    %v449 = vadd.f32 0.0, %v448
    %450 = vmatmul.bf16.gmra.mxu0 %v354
    %v451 = vpop.f32.mrf.mxu0
    %v452 = vadd.f32 0.0, %v451
    %v453 = vpop.f32.mrf.mxu0
    %v454 = vadd.f32 0.0, %v453
    %455 = vmatmul.bf16.gmra.mxu0 %v355
    %v456 = vpop.f32.mrf.mxu0
    %v457 = vadd.f32 0.0, %v456
    %v458 = vpop.f32.mrf.mxu0
    %v459 = vadd.f32 0.0, %v458
    %460 = vdwg.mxu0
    %v461 = vadd.f32 %v268, %v422
    %v462 = vadd.f32 %v269, %v424
    %v463 = vadd.f32 %v270, %v427
    %v464 = vadd.f32 %v271, %v429
    %v465 = vadd.f32 %v272, %v432
    %v466 = vadd.f32 %v273, %v434
    %v467 = vadd.f32 %v274, %v437
    %v468 = vadd.f32 %v275, %v439
    %v469 = vadd.f32 %v276, %v442
    %v470 = vadd.f32 %v277, %v444
    %v471 = vadd.f32 %v278, %v447
    %v472 = vadd.f32 %v279, %v449
    %v473 = vadd.f32 %v280, %v452
    %v474 = vadd.f32 %v281, %v454
    %v475 = vadd.f32 %v282, %v457
    %v476 = vadd.f32 %v283, %v459
    %477 = vst [vmem:[#allocation2] sm:$0xff] %v461
    %478 = vst [vmem:[#allocation2 + $0x8] sm:$0xff] %v462
    %479 = vst [vmem:[#allocation2 + $0x10] sm:$0xff] %v463
    %480 = vst [vmem:[#allocation2 + $0x18] sm:$0xff] %v464
    %481 = vst [vmem:[#allocation2 + $0x20] sm:$0xff] %v465
    %482 = vst [vmem:[#allocation2 + $0x28] sm:$0xff] %v466
    %483 = vst [vmem:[#allocation2 + $0x30] sm:$0xff] %v467
    %484 = vst [vmem:[#allocation2 + $0x38] sm:$0xff] %v468
    %485 = vst [vmem:[#allocation2 + $0x40] sm:$0xff] %v469
    %486 = vst [vmem:[#allocation2 + $0x48] sm:$0xff] %v470
    %487 = vst [vmem:[#allocation2 + $0x50] sm:$0xff] %v471
    %488 = vst [vmem:[#allocation2 + $0x58] sm:$0xff] %v472
    %489 = vst [vmem:[#allocation2 + $0x60] sm:$0xff] %v473
    %490 = vst [vmem:[#allocation2 + $0x68] sm:$0xff] %v474
    %491 = vst [vmem:[#allocation2 + $0x70] sm:$0xff] %v475
    %492 = vst [vmem:[#allocation2 + $0x78] sm:$0xff] %v476
    %v493 = vld [vmem:[#allocation2] sm:$0xff]
    %v494 = vld [vmem:[#allocation2 + $0x8] sm:$0xff]
    %v495 = vld [vmem:[#allocation2 + $0x10] sm:$0xff]
    %v496 = vld [vmem:[#allocation2 + $0x18] sm:$0xff]
    %v497 = vld [vmem:[#allocation2 + $0x20] sm:$0xff]
    %v498 = vld [vmem:[#allocation2 + $0x28] sm:$0xff]
    %v499 = vld [vmem:[#allocation2 + $0x30] sm:$0xff]
    %v500 = vld [vmem:[#allocation2 + $0x38] sm:$0xff]
    %v501 = vld [vmem:[#allocation2 + $0x40] sm:$0xff]
    %v502 = vld [vmem:[#allocation2 + $0x48] sm:$0xff]
    %v503 = vld [vmem:[#allocation2 + $0x50] sm:$0xff]
    %v504 = vld [vmem:[#allocation2 + $0x58] sm:$0xff]
    %v505 = vld [vmem:[#allocation2 + $0x60] sm:$0xff]
    %v506 = vld [vmem:[#allocation2 + $0x68] sm:$0xff]
    %v507 = vld [vmem:[#allocation2 + $0x70] sm:$0xff]
    %v508 = vld [vmem:[#allocation2 + $0x78] sm:$0xff]
    %v509 = vld [vmem:[%s2] sm:$0x1]
    %v511 = vperm.slane %v509, 0
    %v513 = vadd.f32 %v493, %v511
    %v514 = vadd.f32 %v494, %v511
    %v515 = vadd.f32 %v495, %v511
    %v516 = vadd.f32 %v496, %v511
    %v517 = vadd.f32 %v497, %v511
    %v518 = vadd.f32 %v498, %v511
    %v519 = vadd.f32 %v499, %v511
    %v520 = vadd.f32 %v500, %v511
    %v521 = vadd.f32 %v501, %v511
    %v522 = vadd.f32 %v502, %v511
    %v523 = vadd.f32 %v503, %v511
    %v524 = vadd.f32 %v504, %v511
    %v525 = vadd.f32 %v505, %v511
    %v526 = vadd.f32 %v506, %v511
    %v527 = vadd.f32 %v507, %v511
    %v528 = vadd.f32 %v508, %v511
    %v529 = vmax.f32 %v513, 0.0
    %v530 = vmax.f32 %v514, 0.0
    %v531 = vmax.f32 %v515, 0.0
    %v532 = vmax.f32 %v516, 0.0
    %v533 = vmax.f32 %v517, 0.0
    %v534 = vmax.f32 %v518, 0.0
    %v535 = vmax.f32 %v519, 0.0
    %v536 = vmax.f32 %v520, 0.0
    %v537 = vmax.f32 %v521, 0.0
    %v538 = vmax.f32 %v522, 0.0
    %v539 = vmax.f32 %v523, 0.0
    %v540 = vmax.f32 %v524, 0.0
    %v541 = vmax.f32 %v525, 0.0
    %v542 = vmax.f32 %v526, 0.0
    %v543 = vmax.f32 %v527, 0.0
    %v544 = vmax.f32 %v528, 0.0
    %545 = vst [vmem:[%s5] sm:$0xff] %v529
    %546 = vst [vmem:[%s5 + $0x8] sm:$0xff] %v530
    %547 = vst [vmem:[%s5 + $0x10] sm:$0xff] %v531
    %548 = vst [vmem:[%s5 + $0x18] sm:$0xff] %v532
    %549 = vst [vmem:[%s5 + $0x20] sm:$0xff] %v533
    %550 = vst [vmem:[%s5 + $0x28] sm:$0xff] %v534
    %551 = vst [vmem:[%s5 + $0x30] sm:$0xff] %v535
    %552 = vst [vmem:[%s5 + $0x38] sm:$0xff] %v536
    %553 = vst [vmem:[%s5 + $0x40] sm:$0xff] %v537
    %554 = vst [vmem:[%s5 + $0x48] sm:$0xff] %v538
    %555 = vst [vmem:[%s5 + $0x50] sm:$0xff] %v539
    %556 = vst [vmem:[%s5 + $0x58] sm:$0xff] %v540
    %557 = vst [vmem:[%s5 + $0x60] sm:$0xff] %v541
    %558 = vst [vmem:[%s5 + $0x68] sm:$0xff] %v542
    %559 = vst [vmem:[%s5 + $0x70] sm:$0xff] %v543
    %560 = vst [vmem:[%s5 + $0x78] sm:$0xff] %v544
  $region29: #{basic_block_forward.3} parent=0 // pred_fallthru
    _
  // Predicated region
  $region30: #{basic_block_forward.3} parent=0 // pred_check
    _
  $region31: #{basic_block_forward.3} parent=0 // pred_check_branch
    %562 = sbr.rel (0) target = $region33
  $region32: #{basic_block_forward.3} parent=0 // pred_region
    _
  $region33: #{basic_block_forward.3} parent=0 // pred_fallthru
    _
  // Predicated region
  $region34: #{basic_block_forward.3} parent=0 // pred_check
    _
  $region35: #{basic_block_forward.3} parent=0 // pred_check_branch
    %564 = sbr.rel (0) target = $region37
  $region36: #{basic_block_forward.3} parent=0 // pred_region
    _
  $region37: #{basic_block_forward.3} parent=0 // pred_fallthru
    _

</llo_original>
